<compile_context>
chip_gen: v7x
topology: tpu7x:2x2x1
jax: 0.10.0
libtpu: 0.0.40
codegen_flags: <defaults>
</compile_context>

<pallas_src>
import functools

import numpy as np
import jax
import jax.numpy as jnp
from jax.experimental import pallas as pl
from jax.experimental.pallas import tpu as pltpu


def _ohkm_mse_kernel(pred_ref, gt_ref, w_ref, o_ref, *, topk, use_target_weight):
    """Fused weighted-MSE + OHKM top-k loss.

    pred_ref / gt_ref : (B, J, HW) f32   (HW lane-dense, multiple of 128)
    w_ref             : (B, J)     f32
    o_ref             : (1, 1)     f32   (scalar loss)
    """
    d = pred_ref[...] - gt_ref[...]                       # (B, J, HW)
    per_joint = 0.5 * jnp.mean(d * d, axis=-1)            # (B, J)
    if use_target_weight:
        w = w_ref[...]                                    # (B, J)
        per_joint = per_joint * (w * w)

    B, J = per_joint.shape
    lane_ids = jax.lax.broadcasted_iota(jnp.int32, (B, J), 1).astype(jnp.float32)
    sentinel = float(J)

    remaining = per_joint
    acc = jnp.zeros((B, 1), jnp.float32)
    # Iteratively extract the k largest per row (k is small & static).
    # Tie-safe: mask exactly one (the first) argmax position each iteration.
    for _ in range(topk):
        cur = jnp.max(remaining, axis=-1, keepdims=True)               # (B, 1)
        acc = acc + cur
        hit = jnp.where(remaining == cur, lane_ids, sentinel)          # (B, J)
        first = jnp.min(hit, axis=-1, keepdims=True)                   # (B, 1)
        remaining = jnp.where(lane_ids == first, -jnp.inf, remaining)

    total = jnp.sum(acc, axis=0, keepdims=True)                        # (1, 1)
    o_ref[...] = total * (1.0 / float(topk * B))


def joints_ohkm_mse_loss(outs, targets, target_weights, *,
                         use_target_weight=True, topk=8):
    B, J, H, W = outs.shape
    HW = H * W
    pred = outs.reshape(B, J, HW).astype(jnp.float32)
    gt = targets.reshape(B, J, HW).astype(jnp.float32)
    w = target_weights.reshape(B, J).astype(jnp.float32)

    out = pl.pallas_call(
        functools.partial(_ohkm_mse_kernel, topk=topk,
                          use_target_weight=use_target_weight),
        out_shape=jax.ShapeDtypeStruct((1, 1), jnp.float32),
        grid=(1,),
        in_specs=[
            pl.BlockSpec((B, J, HW), lambda i: (0, 0, 0)),
            pl.BlockSpec((B, J, HW), lambda i: (0, 0, 0)),
            pl.BlockSpec((B, J), lambda i: (0, 0)),
        ],
        out_specs=pl.BlockSpec((1, 1), lambda i: (0, 0)),
        compiler_params=pltpu.CompilerParams(
            dimension_semantics=("arbitrary",)),
    )(pred, gt, w)
    return out[0, 0]


def reference_loss(outs, targets, target_weights, *, use_target_weight, topk):
    """Pure-JAX reference mirroring the PyTorch forward (intended semantics)."""
    B, J = outs.shape[:2]
    pred = outs.reshape(B, J, -1)
    gt = targets.reshape(B, J, -1)
    if use_target_weight:
        w = target_weights.reshape(B, J, 1)
        pred = pred * w
        gt = gt * w
    per_joint = 0.5 * jnp.mean((pred - gt) ** 2, axis=-1)   # (B, J)
    topv, _ = jax.lax.top_k(per_joint, topk)                # (B, topk)
    return jnp.mean(jnp.sum(topv, axis=-1) / topk)


if __name__ == "__main__":
    key = jax.random.PRNGKey(0)
    B, J, H, W = 4, 16, 16, 16        # batch, joints, heatmap H, heatmap W
    topk = 8
    use_target_weight = True

    k1, k2, k3 = jax.random.split(key, 3)
    outs = jax.random.uniform(k1, (B, J, H, W), dtype=jnp.float32)
    targets = jax.random.uniform(k2, (B, J, H, W), dtype=jnp.float32)
    target_weights = jax.random.uniform(k3, (B, J, 1), dtype=jnp.float32)

    loss = joints_ohkm_mse_loss(outs, targets, target_weights,
                                use_target_weight=use_target_weight, topk=topk)
    loss = jax.block_until_ready(loss)

    ref = reference_loss(outs, targets, target_weights,
                         use_target_weight=use_target_weight, topk=topk)
    np.testing.assert_allclose(np.asarray(loss), np.asarray(ref),
                               rtol=1e-4, atol=1e-6)
    assert np.isfinite(np.asarray(loss))
    print("KERNEL_OK")
</pallas_src>

<mosaic_0001>
module attributes {stable_mosaic.version = 11 : i64} {
  func.func @_ohkm_mse_kernel(%arg0: i32, %arg1: memref<4x16x256xf32, #tpu.memory_space<vmem>>, %arg2: memref<4x16x256xf32, #tpu.memory_space<vmem>>, %arg3: memref<4x16xf32, #tpu.memory_space<vmem>>, %arg4: memref<1x1xf32, #tpu.memory_space<vmem>>) attributes {dimension_semantics = [#tpu.dimension_semantics<arbitrary>], iteration_bounds = array<i64: 1>, scalar_prefetch = 0 : i64, scratch_operands = 0 : i64, tpu.core_type = #tpu.core_type<tc>, window_params = [{pipeline_mode = #tpu.pipeline_mode<synchronous>, transform_indices = @transform_0, window_bounds = array<i64: 4, 16, 256>}, {pipeline_mode = #tpu.pipeline_mode<synchronous>, transform_indices = @transform_1, window_bounds = array<i64: 4, 16, 256>}, {pipeline_mode = #tpu.pipeline_mode<synchronous>, transform_indices = @transform_2, window_bounds = array<i64: 4, 16>}, {pipeline_mode = #tpu.pipeline_mode<synchronous>, transform_indices = @transform_3, window_bounds = array<i64: 1, 1>}]} {
    %c0 = arith.constant 0 : index
    %c0_0 = arith.constant 0 : index
    %c0_1 = arith.constant 0 : index
    %0 = vector.load %arg1[%c0, %c0_0, %c0_1] : memref<4x16x256xf32, #tpu.memory_space<vmem>>, vector<4x16x256xf32>
    %c0_2 = arith.constant 0 : index
    %c0_3 = arith.constant 0 : index
    %c0_4 = arith.constant 0 : index
    %1 = vector.load %arg2[%c0_2, %c0_3, %c0_4] : memref<4x16x256xf32, #tpu.memory_space<vmem>>, vector<4x16x256xf32>
    %2 = arith.subf %0, %1 : vector<4x16x256xf32>
    %3 = arith.mulf %2, %2 : vector<4x16x256xf32>
    %cst = arith.constant dense<0.000000e+00> : vector<4x16xf32>
    %4 = vector.multi_reduction <add>, %3, %cst [2] : vector<4x16x256xf32> to vector<4x16xf32>
    %cst_5 = arith.constant 2.560000e+02 : f32
    %5 = vector.broadcast %cst_5 : f32 to vector<4x16xf32>
    %6 = arith.divf %4, %5 : vector<4x16xf32>
    %cst_6 = arith.constant 5.000000e-01 : f32
    %7 = vector.broadcast %cst_6 : f32 to vector<4x16xf32>
    %8 = arith.mulf %7, %6 : vector<4x16xf32>
    %c0_7 = arith.constant 0 : index
    %c0_8 = arith.constant 0 : index
    %9 = vector.load %arg3[%c0_7, %c0_8] : memref<4x16xf32, #tpu.memory_space<vmem>>, vector<4x16xf32>
    %10 = arith.mulf %9, %9 : vector<4x16xf32>
    %11 = arith.mulf %8, %10 : vector<4x16xf32>
    %12 = tpu.iota {dimensions = array<i32: 1>} : vector<4x16xi32>
    %13 = arith.sitofp %12 : vector<4x16xi32> to vector<4x16xf32>
    %cst_9 = arith.constant 0.000000e+00 : f32
    %14 = vector.broadcast %cst_9 : f32 to vector<4x1xf32>
    %cst_10 = arith.constant dense<0xFF800000> : vector<4xf32>
    %15 = vector.multi_reduction <maximumf>, %11, %cst_10 [1] : vector<4x16xf32> to vector<4xf32>
    %16 = vector.shape_cast %15 : vector<4xf32> to vector<4x1xf32>
    %17 = arith.addf %14, %16 : vector<4x1xf32>
    %18 = vector.broadcast %16 : vector<4x1xf32> to vector<4x16xf32>
    %19 = arith.cmpf oeq, %11, %18 : vector<4x16xf32>
    %cst_11 = arith.constant 1.600000e+01 : f32
    %20 = vector.broadcast %cst_11 : f32 to vector<4x16xf32>
    %21 = arith.select %19, %13, %20 : vector<4x16xi1>, vector<4x16xf32>
    %cst_12 = arith.constant dense<0x7F800000> : vector<4xf32>
    %22 = vector.multi_reduction <minimumf>, %21, %cst_12 [1] : vector<4x16xf32> to vector<4xf32>
    %23 = vector.shape_cast %22 : vector<4xf32> to vector<4x1xf32>
    %24 = vector.broadcast %23 : vector<4x1xf32> to vector<4x16xf32>
    %25 = arith.cmpf oeq, %13, %24 : vector<4x16xf32>
    %cst_13 = arith.constant 0xFF800000 : f32
    %26 = vector.broadcast %cst_13 : f32 to vector<4x16xf32>
    %27 = arith.select %25, %26, %11 : vector<4x16xi1>, vector<4x16xf32>
    %cst_14 = arith.constant dense<0xFF800000> : vector<4xf32>
    %28 = vector.multi_reduction <maximumf>, %27, %cst_14 [1] : vector<4x16xf32> to vector<4xf32>
    %29 = vector.shape_cast %28 : vector<4xf32> to vector<4x1xf32>
    %30 = arith.addf %17, %29 : vector<4x1xf32>
    %31 = vector.broadcast %29 : vector<4x1xf32> to vector<4x16xf32>
    %32 = arith.cmpf oeq, %27, %31 : vector<4x16xf32>
    %cst_15 = arith.constant 1.600000e+01 : f32
    %33 = vector.broadcast %cst_15 : f32 to vector<4x16xf32>
    %34 = arith.select %32, %13, %33 : vector<4x16xi1>, vector<4x16xf32>
    %cst_16 = arith.constant dense<0x7F800000> : vector<4xf32>
    %35 = vector.multi_reduction <minimumf>, %34, %cst_16 [1] : vector<4x16xf32> to vector<4xf32>
    %36 = vector.shape_cast %35 : vector<4xf32> to vector<4x1xf32>
    %37 = vector.broadcast %36 : vector<4x1xf32> to vector<4x16xf32>
    %38 = arith.cmpf oeq, %13, %37 : vector<4x16xf32>
    %cst_17 = arith.constant 0xFF800000 : f32
    %39 = vector.broadcast %cst_17 : f32 to vector<4x16xf32>
    %40 = arith.select %38, %39, %27 : vector<4x16xi1>, vector<4x16xf32>
    %cst_18 = arith.constant dense<0xFF800000> : vector<4xf32>
    %41 = vector.multi_reduction <maximumf>, %40, %cst_18 [1] : vector<4x16xf32> to vector<4xf32>
    %42 = vector.shape_cast %41 : vector<4xf32> to vector<4x1xf32>
    %43 = arith.addf %30, %42 : vector<4x1xf32>
    %44 = vector.broadcast %42 : vector<4x1xf32> to vector<4x16xf32>
    %45 = arith.cmpf oeq, %40, %44 : vector<4x16xf32>
    %cst_19 = arith.constant 1.600000e+01 : f32
    %46 = vector.broadcast %cst_19 : f32 to vector<4x16xf32>
    %47 = arith.select %45, %13, %46 : vector<4x16xi1>, vector<4x16xf32>
    %cst_20 = arith.constant dense<0x7F800000> : vector<4xf32>
    %48 = vector.multi_reduction <minimumf>, %47, %cst_20 [1] : vector<4x16xf32> to vector<4xf32>
    %49 = vector.shape_cast %48 : vector<4xf32> to vector<4x1xf32>
    %50 = vector.broadcast %49 : vector<4x1xf32> to vector<4x16xf32>
    %51 = arith.cmpf oeq, %13, %50 : vector<4x16xf32>
    %cst_21 = arith.constant 0xFF800000 : f32
    %52 = vector.broadcast %cst_21 : f32 to vector<4x16xf32>
    %53 = arith.select %51, %52, %40 : vector<4x16xi1>, vector<4x16xf32>
    %cst_22 = arith.constant dense<0xFF800000> : vector<4xf32>
    %54 = vector.multi_reduction <maximumf>, %53, %cst_22 [1] : vector<4x16xf32> to vector<4xf32>
    %55 = vector.shape_cast %54 : vector<4xf32> to vector<4x1xf32>
    %56 = arith.addf %43, %55 : vector<4x1xf32>
    %57 = vector.broadcast %55 : vector<4x1xf32> to vector<4x16xf32>
    %58 = arith.cmpf oeq, %53, %57 : vector<4x16xf32>
    %cst_23 = arith.constant 1.600000e+01 : f32
    %59 = vector.broadcast %cst_23 : f32 to vector<4x16xf32>
    %60 = arith.select %58, %13, %59 : vector<4x16xi1>, vector<4x16xf32>
    %cst_24 = arith.constant dense<0x7F800000> : vector<4xf32>
    %61 = vector.multi_reduction <minimumf>, %60, %cst_24 [1] : vector<4x16xf32> to vector<4xf32>
    %62 = vector.shape_cast %61 : vector<4xf32> to vector<4x1xf32>
    %63 = vector.broadcast %62 : vector<4x1xf32> to vector<4x16xf32>
    %64 = arith.cmpf oeq, %13, %63 : vector<4x16xf32>
    %cst_25 = arith.constant 0xFF800000 : f32
    %65 = vector.broadcast %cst_25 : f32 to vector<4x16xf32>
    %66 = arith.select %64, %65, %53 : vector<4x16xi1>, vector<4x16xf32>
    %cst_26 = arith.constant dense<0xFF800000> : vector<4xf32>
    %67 = vector.multi_reduction <maximumf>, %66, %cst_26 [1] : vector<4x16xf32> to vector<4xf32>
    %68 = vector.shape_cast %67 : vector<4xf32> to vector<4x1xf32>
    %69 = arith.addf %56, %68 : vector<4x1xf32>
    %70 = vector.broadcast %68 : vector<4x1xf32> to vector<4x16xf32>
    %71 = arith.cmpf oeq, %66, %70 : vector<4x16xf32>
    %cst_27 = arith.constant 1.600000e+01 : f32
    %72 = vector.broadcast %cst_27 : f32 to vector<4x16xf32>
    %73 = arith.select %71, %13, %72 : vector<4x16xi1>, vector<4x16xf32>
    %cst_28 = arith.constant dense<0x7F800000> : vector<4xf32>
    %74 = vector.multi_reduction <minimumf>, %73, %cst_28 [1] : vector<4x16xf32> to vector<4xf32>
    %75 = vector.shape_cast %74 : vector<4xf32> to vector<4x1xf32>
    %76 = vector.broadcast %75 : vector<4x1xf32> to vector<4x16xf32>
    %77 = arith.cmpf oeq, %13, %76 : vector<4x16xf32>
    %cst_29 = arith.constant 0xFF800000 : f32
    %78 = vector.broadcast %cst_29 : f32 to vector<4x16xf32>
    %79 = arith.select %77, %78, %66 : vector<4x16xi1>, vector<4x16xf32>
    %cst_30 = arith.constant dense<0xFF800000> : vector<4xf32>
    %80 = vector.multi_reduction <maximumf>, %79, %cst_30 [1] : vector<4x16xf32> to vector<4xf32>
    %81 = vector.shape_cast %80 : vector<4xf32> to vector<4x1xf32>
    %82 = arith.addf %69, %81 : vector<4x1xf32>
    %83 = vector.broadcast %81 : vector<4x1xf32> to vector<4x16xf32>
    %84 = arith.cmpf oeq, %79, %83 : vector<4x16xf32>
    %cst_31 = arith.constant 1.600000e+01 : f32
    %85 = vector.broadcast %cst_31 : f32 to vector<4x16xf32>
    %86 = arith.select %84, %13, %85 : vector<4x16xi1>, vector<4x16xf32>
    %cst_32 = arith.constant dense<0x7F800000> : vector<4xf32>
    %87 = vector.multi_reduction <minimumf>, %86, %cst_32 [1] : vector<4x16xf32> to vector<4xf32>
    %88 = vector.shape_cast %87 : vector<4xf32> to vector<4x1xf32>
    %89 = vector.broadcast %88 : vector<4x1xf32> to vector<4x16xf32>
    %90 = arith.cmpf oeq, %13, %89 : vector<4x16xf32>
    %cst_33 = arith.constant 0xFF800000 : f32
    %91 = vector.broadcast %cst_33 : f32 to vector<4x16xf32>
    %92 = arith.select %90, %91, %79 : vector<4x16xi1>, vector<4x16xf32>
    %cst_34 = arith.constant dense<0xFF800000> : vector<4xf32>
    %93 = vector.multi_reduction <maximumf>, %92, %cst_34 [1] : vector<4x16xf32> to vector<4xf32>
    %94 = vector.shape_cast %93 : vector<4xf32> to vector<4x1xf32>
    %95 = arith.addf %82, %94 : vector<4x1xf32>
    %96 = vector.broadcast %94 : vector<4x1xf32> to vector<4x16xf32>
    %97 = arith.cmpf oeq, %92, %96 : vector<4x16xf32>
    %cst_35 = arith.constant 1.600000e+01 : f32
    %98 = vector.broadcast %cst_35 : f32 to vector<4x16xf32>
    %99 = arith.select %97, %13, %98 : vector<4x16xi1>, vector<4x16xf32>
    %cst_36 = arith.constant dense<0x7F800000> : vector<4xf32>
    %100 = vector.multi_reduction <minimumf>, %99, %cst_36 [1] : vector<4x16xf32> to vector<4xf32>
    %101 = vector.shape_cast %100 : vector<4xf32> to vector<4x1xf32>
    %102 = vector.broadcast %101 : vector<4x1xf32> to vector<4x16xf32>
    %103 = arith.cmpf oeq, %13, %102 : vector<4x16xf32>
    %cst_37 = arith.constant 0xFF800000 : f32
    %104 = vector.broadcast %cst_37 : f32 to vector<4x16xf32>
    %105 = arith.select %103, %104, %92 : vector<4x16xi1>, vector<4x16xf32>
    %cst_38 = arith.constant dense<0xFF800000> : vector<4xf32>
    %106 = vector.multi_reduction <maximumf>, %105, %cst_38 [1] : vector<4x16xf32> to vector<4xf32>
    %107 = vector.shape_cast %106 : vector<4xf32> to vector<4x1xf32>
    %108 = arith.addf %95, %107 : vector<4x1xf32>
    %cst_39 = arith.constant dense<0.000000e+00> : vector<1xf32>
    %109 = vector.multi_reduction <add>, %108, %cst_39 [0] : vector<4x1xf32> to vector<1xf32>
    %110 = vector.shape_cast %109 : vector<1xf32> to vector<1x1xf32>
    %cst_40 = arith.constant 3.125000e-02 : f32
    %111 = vector.broadcast %cst_40 : f32 to vector<1x1xf32>
    %112 = arith.mulf %110, %111 : vector<1x1xf32>
    %c0_41 = arith.constant 0 : index
    %c0_42 = arith.constant 0 : index
    %113 = vector.load %arg4[%c0_41, %c0_42] : memref<1x1xf32, #tpu.memory_space<vmem>>, vector<1x1xf32>
    tpu.vector_store %arg4[%c0_41, %c0_42], %112 {strides = array<i32>} : memref<1x1xf32, #tpu.memory_space<vmem>>, vector<1x1xf32>,
    return
  }
  func.func @transform_0(%arg0: i32) -> (i32, i32, i32) {
    %c0_i32 = arith.constant 0 : i32
    %c0_i32_0 = arith.constant 0 : i32
    %c0_i32_1 = arith.constant 0 : i32
    %c0_i32_2 = arith.constant 0 : i32
    return %c0_i32, %c0_i32_0, %c0_i32_1 : i32, i32, i32
  }
  func.func @transform_1(%arg0: i32) -> (i32, i32, i32) {
    %c0_i32 = arith.constant 0 : i32
    %c0_i32_0 = arith.constant 0 : i32
    %c0_i32_1 = arith.constant 0 : i32
    %c0_i32_2 = arith.constant 0 : i32
    return %c0_i32, %c0_i32_0, %c0_i32_1 : i32, i32, i32
  }
  func.func @transform_2(%arg0: i32) -> (i32, i32) {
    %c0_i32 = arith.constant 0 : i32
    %c0_i32_0 = arith.constant 0 : i32
    %c0_i32_1 = arith.constant 0 : i32
    return %c0_i32, %c0_i32_0 : i32, i32
  }
  func.func @transform_3(%arg0: i32) -> (i32, i32) {
    %c0_i32 = arith.constant 0 : i32
    %c0_i32_0 = arith.constant 0 : i32
    %c0_i32_1 = arith.constant 0 : i32
    return %c0_i32, %c0_i32_0 : i32, i32
  }
}

</mosaic_0001>

<llo_original>
// kernel: tpu_custom_call.1
$region0: #{tpu_custom_call.1}
  #allocation0 [shape = 'u32[]', space=smem, size = 0x4, offset = 0x4, fixed_abs, tag = 'smem constant byte address 0x4 - core index']
  #allocation1 [shape = 'u32[144,128]{1,0:T(1,128)}', space=vmem, size = 0x12000, scoped, tag = 'internal scratch']
  %s0 = inlined_call_operand.hbm [shape: f32[4,16,256], index: 0, kind: input, shape index: {}]
  %s1 = inlined_call_operand.hbm [shape: f32[4,16,256], index: 1, kind: input, shape index: {}]
  %s2 = inlined_call_operand.vmem [shape: f32[4,16], index: 2, kind: input, shape index: {}]
  %s3 = inlined_call_operand.hbm [shape: f32[1,1], index: 3, kind: output, shape index: {}]
  %s4 = sld [smem:[#allocation0]]
  $region30: #{tpu_custom_call.1} parent=0
    _
  %s6 = ssub.s32 1, %s4
  %s7 = scalar_select 0, %s6, %s4
  $region1: #{tpu_custom_call.1} parent=0
    #allocation2 [shape = 'u8[65536]{0}', space=vmem, size = 0x10000, scoped, tag = 'input window, operand 0, single buffered']
    #allocation3 [shape = 's32[1]{0}', space=sflag, size = 0x4, scoped, tag = 'scoped memory for tpu_custom_call.1']
    #allocation4 [shape = 's32[1]{0}', space=sflag, size = 0x4, scoped, tag = 'scoped memory for tpu_custom_call.1']
    #allocation5 [shape = 'u8[65536]{0}', space=vmem, size = 0x10000, scoped, tag = 'input window, operand 1, single buffered']
    #allocation6 [shape = 's32[1]{0}', space=sflag, size = 0x4, scoped, tag = 'scoped memory for tpu_custom_call.1']
    #allocation7 [shape = 'u8[512]{0}', space=vmem, size = 0x400, scoped, tag = 'output window, operand 0, single buffered']
    %8 = vsyncpa [#allocation3], 0
    %9 = vsyncpa [#allocation6], 0
    %10 = vsyncpa [#allocation4], 0
    // Predicated region
    $region2: #{tpu_custom_call.1} parent=1 // pred_check
      _
    $region3: #{tpu_custom_call.1} parent=1 // pred_check_branch
      %12 = sbr.rel (0) target = $region5
    $region4: #{tpu_custom_call.1} parent=1 // pred_region
      %s14 = ssub.s32 2048, 2048
      %15 = vsyncadd [#allocation3], %s14
      %s16 = sshll.u32 [#allocation2], 4
      %s17 = int_to_ptr.vmem [resolvable:$true] %s16
      %22 = dma.hbm_to_vmem [thread:$0]  %s0, 2048, %s17, [#allocation3], 256, 256, 16
    $region5: #{tpu_custom_call.1} parent=1 // pred_fallthru
      _
    // Predicated region
    $region6: #{tpu_custom_call.1} parent=1 // pred_check
      _
    $region7: #{tpu_custom_call.1} parent=1 // pred_check_branch
      %24 = sbr.rel (0) target = $region9
    $region8: #{tpu_custom_call.1} parent=1 // pred_region
      %s26 = ssub.s32 2048, 2048
      %27 = vsyncadd [#allocation6], %s26
      %s28 = sshll.u32 [#allocation5], 4
      %s29 = int_to_ptr.vmem [resolvable:$true] %s28
      %34 = dma.hbm_to_vmem [thread:$0]  %s1, 2048, %s29, [#allocation6], 256, 256, 16
    $region9: #{tpu_custom_call.1} parent=1 // pred_fallthru
      _
    // Predicated region
    $region10: #{tpu_custom_call.1} parent=1 // pred_check
      _
    $region11: #{tpu_custom_call.1} parent=1 // pred_check_branch
      %36 = sbr.rel (0) target = $region13
    $region12: #{tpu_custom_call.1} parent=1 // pred_region
      _
    $region13: #{tpu_custom_call.1} parent=1 // pred_fallthru
      _
    // Predicated region
    $region14: #{tpu_custom_call.1} parent=1 // pred_check
      _
    $region15: #{tpu_custom_call.1} parent=1 // pred_check_branch
      %38 = sbr.rel (0) target = $region17
    $region16: #{tpu_custom_call.1} parent=1 // pred_region
      %39 = dma.done [#allocation3], 2048
    $region17: #{tpu_custom_call.1} parent=1 // pred_fallthru
      _
    // Predicated region
    $region18: #{tpu_custom_call.1} parent=1 // pred_check
      _
    $region19: #{tpu_custom_call.1} parent=1 // pred_check_branch
      %41 = sbr.rel (0) target = $region21
    $region20: #{tpu_custom_call.1} parent=1 // pred_region
      %42 = dma.done [#allocation6], 2048
    $region21: #{tpu_custom_call.1} parent=1 // pred_fallthru
      _
    %v43 = vld [vmem:[#allocation2] sm:$0xff]
    %v44 = vld [vmem:[#allocation2 + $0x8] sm:$0xff]
    %v45 = vld [vmem:[#allocation2 + $0x10] sm:$0xff]
    %v46 = vld [vmem:[#allocation2 + $0x18] sm:$0xff]
    %v47 = vld [vmem:[#allocation2 + $0x20] sm:$0xff]
    %v48 = vld [vmem:[#allocation2 + $0x28] sm:$0xff]
    %v49 = vld [vmem:[#allocation2 + $0x30] sm:$0xff]
    %v50 = vld [vmem:[#allocation2 + $0x38] sm:$0xff]
    %v51 = vld [vmem:[#allocation2 + $0x40] sm:$0xff]
    %v52 = vld [vmem:[#allocation2 + $0x48] sm:$0xff]
    %v53 = vld [vmem:[#allocation2 + $0x50] sm:$0xff]
    %v54 = vld [vmem:[#allocation2 + $0x58] sm:$0xff]
    %v55 = vld [vmem:[#allocation2 + $0x60] sm:$0xff]
    %v56 = vld [vmem:[#allocation2 + $0x68] sm:$0xff]
    %v57 = vld [vmem:[#allocation2 + $0x70] sm:$0xff]
    %v58 = vld [vmem:[#allocation2 + $0x78] sm:$0xff]
    %v59 = vld [vmem:[#allocation5] sm:$0xff]
    %v60 = vld [vmem:[#allocation5 + $0x8] sm:$0xff]
    %v61 = vld [vmem:[#allocation5 + $0x10] sm:$0xff]
    %v62 = vld [vmem:[#allocation5 + $0x18] sm:$0xff]
    %v63 = vld [vmem:[#allocation5 + $0x20] sm:$0xff]
    %v64 = vld [vmem:[#allocation5 + $0x28] sm:$0xff]
    %v65 = vld [vmem:[#allocation5 + $0x30] sm:$0xff]
    %v66 = vld [vmem:[#allocation5 + $0x38] sm:$0xff]
    %v67 = vld [vmem:[#allocation5 + $0x40] sm:$0xff]
    %v68 = vld [vmem:[#allocation5 + $0x48] sm:$0xff]
    %v69 = vld [vmem:[#allocation5 + $0x50] sm:$0xff]
    %v70 = vld [vmem:[#allocation5 + $0x58] sm:$0xff]
    %v71 = vld [vmem:[#allocation5 + $0x60] sm:$0xff]
    %v72 = vld [vmem:[#allocation5 + $0x68] sm:$0xff]
    %v73 = vld [vmem:[#allocation5 + $0x70] sm:$0xff]
    %v74 = vld [vmem:[#allocation5 + $0x78] sm:$0xff]
    %v75 = vsub.f32 %v43, %v59
    %v76 = vsub.f32 %v44, %v60
    %v77 = vsub.f32 %v45, %v61
    %v78 = vsub.f32 %v46, %v62
    %v79 = vsub.f32 %v47, %v63
    %v80 = vsub.f32 %v48, %v64
    %v81 = vsub.f32 %v49, %v65
    %v82 = vsub.f32 %v50, %v66
    %v83 = vsub.f32 %v51, %v67
    %v84 = vsub.f32 %v52, %v68
    %v85 = vsub.f32 %v53, %v69
    %v86 = vsub.f32 %v54, %v70
    %v87 = vsub.f32 %v55, %v71
    %v88 = vsub.f32 %v56, %v72
    %v89 = vsub.f32 %v57, %v73
    %v90 = vsub.f32 %v58, %v74
    %v91 = vmul.f32 %v75, %v75
    %v92 = vmul.f32 %v76, %v76
    %v93 = vmul.f32 %v77, %v77
    %v94 = vmul.f32 %v78, %v78
    %v95 = vmul.f32 %v79, %v79
    %v96 = vmul.f32 %v80, %v80
    %v97 = vmul.f32 %v81, %v81
    %v98 = vmul.f32 %v82, %v82
    %v99 = vmul.f32 %v83, %v83
    %v100 = vmul.f32 %v84, %v84
    %v101 = vmul.f32 %v85, %v85
    %v102 = vmul.f32 %v86, %v86
    %v103 = vmul.f32 %v87, %v87
    %v104 = vmul.f32 %v88, %v88
    %v105 = vmul.f32 %v89, %v89
    %v106 = vmul.f32 %v90, %v90
    %v107 = vadd.f32 %v91, %v92
    %108 = vadd.xlane.f32.xlu0 %v107
    %v109 = vpop.xlane.xlu0 %108
    %v110 = vadd.f32 %v93, %v94
    %111 = vadd.xlane.f32.xlu0 %v110
    %v112 = vpop.xlane.xlu0 %111
    %v113 = vadd.f32 %v95, %v96
    %114 = vadd.xlane.f32.xlu0 %v113
    %v115 = vpop.xlane.xlu0 %114
    %v116 = vadd.f32 %v97, %v98
    %117 = vadd.xlane.f32.xlu0 %v116
    %v118 = vpop.xlane.xlu0 %117
    %v119 = vadd.f32 %v99, %v100
    %120 = vadd.xlane.f32.xlu0 %v119
    %v121 = vpop.xlane.xlu0 %120
    %v122 = vadd.f32 %v101, %v102
    %123 = vadd.xlane.f32.xlu0 %v122
    %v124 = vpop.xlane.xlu0 %123
    %v125 = vadd.f32 %v103, %v104
    %126 = vadd.xlane.f32.xlu0 %v125
    %v127 = vpop.xlane.xlu0 %126
    %v128 = vadd.f32 %v105, %v106
    %129 = vadd.xlane.f32.xlu0 %v128
    %v130 = vpop.xlane.xlu0 %129
    %v131 = vrcp.pop 256.0
    %v132 = vmul.f32 %v109, %v131
    %v133 = vmul.f32 %v112, %v131
    %v134 = vmul.f32 %v115, %v131
    %v135 = vmul.f32 %v118, %v131
    %v136 = vmul.f32 %v121, %v131
    %v137 = vmul.f32 %v124, %v131
    %v138 = vmul.f32 %v127, %v131
    %v139 = vmul.f32 %v130, %v131
    %v140 = vmul.f32 %v132, 0.5
    %v141 = vmul.f32 %v133, 0.5
    %v142 = vmul.f32 %v134, 0.5
    %v143 = vmul.f32 %v135, 0.5
    %v144 = vmul.f32 %v136, 0.5
    %v145 = vmul.f32 %v137, 0.5
    %v146 = vmul.f32 %v138, 0.5
    %v147 = vmul.f32 %v139, 0.5
    %v148 = vld [vmem:[%s2] sm:$0xf]
    %v149 = vmul.f32 %v148, %v148
    %v151 = vlaneseq
    %v152 = vshrl.u32 %v151, 7
    %v153 = vsub.s32 0, %v152
    %v154 = vrot.slane %v149, %v153
    %156 = vbcast.lane.b32.xlu0 %v154, 256
    %v157 = vpop.permute.xlu0 %156
    %s159 = sor.u32 256, 8
    %160 = vbcast.lane.b32.xlu0 %v154, %s159
    %v161 = vpop.permute.xlu0 %160
    %v162 = vlaneseq
    %v163 = vshrl.u32 %v162, 7
    %v164 = vsub.s32 1, %v163
    %v165 = vrot.slane %v149, %v164
    %167 = vbcast.lane.b32.xlu0 %v165, 256
    %v168 = vpop.permute.xlu0 %167
    %s170 = sor.u32 256, 8
    %171 = vbcast.lane.b32.xlu0 %v165, %s170
    %v172 = vpop.permute.xlu0 %171
    %v173 = vlaneseq
    %v174 = vshrl.u32 %v173, 7
    %v175 = vsub.s32 2, %v174
    %v176 = vrot.slane %v149, %v175
    %178 = vbcast.lane.b32.xlu0 %v176, 256
    %v179 = vpop.permute.xlu0 %178
    %s181 = sor.u32 256, 8
    %182 = vbcast.lane.b32.xlu0 %v176, %s181
    %v183 = vpop.permute.xlu0 %182
    %v184 = vlaneseq
    %v185 = vshrl.u32 %v184, 7
    %v186 = vsub.s32 3, %v185
    %v187 = vrot.slane %v149, %v186
    %189 = vbcast.lane.b32.xlu0 %v187, 256
    %v190 = vpop.permute.xlu0 %189
    %s192 = sor.u32 256, 8
    %193 = vbcast.lane.b32.xlu0 %v187, %s192
    %v194 = vpop.permute.xlu0 %193
    %v203 = vmul.f32 %v140, %v157
    %v204 = vmul.f32 %v141, %v161
    %v205 = vmul.f32 %v142, %v168
    %v206 = vmul.f32 %v143, %v172
    %v207 = vmul.f32 %v144, %v179
    %v208 = vmul.f32 %v145, %v183
    %v209 = vmul.f32 %v146, %v190
    %v210 = vmul.f32 %v147, %v194
    %v211 = vlaneseq
    %v212 = vand.u32 %v211, 127
    %v213 = vcvt.s32.f32 %v212
    %222 = vset.pattern.permute.xlu0 0
    %223 = vperm.xlu0 %222, %v203
    %v224 = vpop.permute.xlu0 %223
    %225 = vset.pattern.permute.xlu0 0
    %226 = vperm.xlu0 %225, %v204
    %v227 = vpop.permute.xlu0 %226
    %228 = vset.pattern.permute.xlu0 0
    %229 = vperm.xlu0 %228, %v205
    %v230 = vpop.permute.xlu0 %229
    %231 = vset.pattern.permute.xlu0 0
    %232 = vperm.xlu0 %231, %v206
    %v233 = vpop.permute.xlu0 %232
    %234 = vset.pattern.permute.xlu0 0
    %235 = vperm.xlu0 %234, %v207
    %v236 = vpop.permute.xlu0 %235
    %237 = vset.pattern.permute.xlu0 0
    %238 = vperm.xlu0 %237, %v208
    %v239 = vpop.permute.xlu0 %238
    %240 = vset.pattern.permute.xlu0 0
    %241 = vperm.xlu0 %240, %v209
    %v242 = vpop.permute.xlu0 %241
    %243 = vset.pattern.permute.xlu0 0
    %244 = vperm.xlu0 %243, %v210
    %v245 = vpop.permute.xlu0 %244
    %v246 = vlaneseq
    %v247 = vshrl.u32 %v246, 7
    %v248 = vsub.s32 %v212, %v247
    %v249 = vrot.slane %v224, %v248
    %v250 = vadd.s32 %v212, 4294967288
    %v251 = vlaneseq
    %v252 = vshrl.u32 %v251, 7
    %v253 = vsub.s32 %v250, %v252
    %v254 = vrot.slane %v227, %v253
    %vm255 = vcmask 130112
    %v256 = vsel %vm255, %v254, %v249
    %v257 = vlaneseq
    %v258 = vshrl.u32 %v257, 7
    %v259 = vsub.s32 %v212, %v258
    %v260 = vrot.slane %v230, %v259
    %v261 = vlaneseq
    %v262 = vshrl.u32 %v261, 7
    %v263 = vsub.s32 %v250, %v262
    %v264 = vrot.slane %v233, %v263
    %v265 = vsel %vm255, %v264, %v260
    %v266 = vlaneseq
    %v267 = vshrl.u32 %v266, 7
    %v268 = vsub.s32 %v212, %v267
    %v269 = vrot.slane %v236, %v268
    %v270 = vlaneseq
    %v271 = vshrl.u32 %v270, 7
    %v272 = vsub.s32 %v250, %v271
    %v273 = vrot.slane %v239, %v272
    %v274 = vsel %vm255, %v273, %v269
    %v275 = vlaneseq
    %v276 = vshrl.u32 %v275, 7
    %v277 = vsub.s32 %v212, %v276
    %v278 = vrot.slane %v242, %v277
    %v279 = vlaneseq
    %v280 = vshrl.u32 %v279, 7
    %v281 = vsub.s32 %v250, %v280
    %v282 = vrot.slane %v245, %v281
    %v283 = vsel %vm255, %v282, %v278
    %vm284 = vcmask 1041409
    %v285 = vsel %vm284, %v265, %v256
    %vm286 = vcmask 1042434
    %v287 = vsel %vm286, %v274, %v285
    %vm288 = vcmask 1043459
    %v289 = vsel %vm288, %v283, %v287
    %vm291 = vcmask 125952
    %v292 = vsel %vm291, %v289, -inf
    %293 = vmax.xlane.f32.xlu0 %v292
    %v294 = vpop.xlane.xlu0 %293
    %v295 = vadd.f32 %v294, 0.0
    %v297 = vlaneseq
    %v298 = vshrl.u32 %v297, 7
    %v299 = vsub.s32 0, %v298
    %v300 = vrot.slane %v294, %v299
    %v301 = vlaneseq
    %v302 = vshrl.u32 %v301, 7
    %v303 = vsub.s32 1, %v302
    %v304 = vrot.slane %v294, %v303
    %v305 = vlaneseq
    %v306 = vshrl.u32 %v305, 7
    %v307 = vsub.s32 2, %v306
    %v308 = vrot.slane %v294, %v307
    %v309 = vlaneseq
    %v310 = vshrl.u32 %v309, 7
    %v311 = vsub.s32 3, %v310
    %v312 = vrot.slane %v294, %v311
    %vm317 = vcmp.eq.f32.partialorder %v203, %v300
    %vm318 = vcmp.eq.f32.partialorder %v204, %v300
    %vm319 = vcmp.eq.f32.partialorder %v205, %v304
    %vm320 = vcmp.eq.f32.partialorder %v206, %v304
    %vm321 = vcmp.eq.f32.partialorder %v207, %v308
    %vm322 = vcmp.eq.f32.partialorder %v208, %v308
    %vm323 = vcmp.eq.f32.partialorder %v209, %v312
    %vm324 = vcmp.eq.f32.partialorder %v210, %v312
    %327 = vbcast.lane.b32.xlu0 %v213, 256
    %v328 = vpop.permute.xlu0 %327
    %s330 = sor.u32 256, 8
    %331 = vbcast.lane.b32.xlu0 %v213, %s330
    %v332 = vpop.permute.xlu0 %331
    %v335 = vsel %vm317, %v328, 16.0
    %v336 = vsel %vm318, %v332, 16.0
    %v337 = vsel %vm319, %v328, 16.0
    %v338 = vsel %vm320, %v332, 16.0
    %v339 = vsel %vm321, %v328, 16.0
    %v340 = vsel %vm322, %v332, 16.0
    %v341 = vsel %vm323, %v328, 16.0
    %v342 = vsel %vm324, %v332, 16.0
    %351 = vset.pattern.permute.xlu0 0
    %352 = vperm.xlu0 %351, %v335
    %v353 = vpop.permute.xlu0 %352
    %354 = vset.pattern.permute.xlu0 0
    %355 = vperm.xlu0 %354, %v336
    %v356 = vpop.permute.xlu0 %355
    %357 = vset.pattern.permute.xlu0 0
    %358 = vperm.xlu0 %357, %v337
    %v359 = vpop.permute.xlu0 %358
    %360 = vset.pattern.permute.xlu0 0
    %361 = vperm.xlu0 %360, %v338
    %v362 = vpop.permute.xlu0 %361
    %363 = vset.pattern.permute.xlu0 0
    %364 = vperm.xlu0 %363, %v339
    %v365 = vpop.permute.xlu0 %364
    %366 = vset.pattern.permute.xlu0 0
    %367 = vperm.xlu0 %366, %v340
    %v368 = vpop.permute.xlu0 %367
    %369 = vset.pattern.permute.xlu0 0
    %370 = vperm.xlu0 %369, %v341
    %v371 = vpop.permute.xlu0 %370
    %372 = vset.pattern.permute.xlu0 0
    %373 = vperm.xlu0 %372, %v342
    %v374 = vpop.permute.xlu0 %373
    %v375 = vlaneseq
    %v376 = vshrl.u32 %v375, 7
    %v377 = vsub.s32 %v212, %v376
    %v378 = vrot.slane %v353, %v377
    %v379 = vlaneseq
    %v380 = vshrl.u32 %v379, 7
    %v381 = vsub.s32 %v250, %v380
    %v382 = vrot.slane %v356, %v381
    %v383 = vsel %vm255, %v382, %v378
    %v384 = vlaneseq
    %v385 = vshrl.u32 %v384, 7
    %v386 = vsub.s32 %v212, %v385
    %v387 = vrot.slane %v359, %v386
    %v388 = vlaneseq
    %v389 = vshrl.u32 %v388, 7
    %v390 = vsub.s32 %v250, %v389
    %v391 = vrot.slane %v362, %v390
    %v392 = vsel %vm255, %v391, %v387
    %v393 = vlaneseq
    %v394 = vshrl.u32 %v393, 7
    %v395 = vsub.s32 %v212, %v394
    %v396 = vrot.slane %v365, %v395
    %v397 = vlaneseq
    %v398 = vshrl.u32 %v397, 7
    %v399 = vsub.s32 %v250, %v398
    %v400 = vrot.slane %v368, %v399
    %v401 = vsel %vm255, %v400, %v396
    %v402 = vlaneseq
    %v403 = vshrl.u32 %v402, 7
    %v404 = vsub.s32 %v212, %v403
    %v405 = vrot.slane %v371, %v404
    %v406 = vlaneseq
    %v407 = vshrl.u32 %v406, 7
    %v408 = vsub.s32 %v250, %v407
    %v409 = vrot.slane %v374, %v408
    %v410 = vsel %vm255, %v409, %v405
    %v411 = vsel %vm284, %v392, %v383
    %v412 = vsel %vm286, %v401, %v411
    %v413 = vsel %vm288, %v410, %v412
    %v415 = vsel %vm291, %v413, inf
    %416 = vmin.xlane.f32.xlu0 %v415
    %v417 = vpop.xlane.xlu0 %416
    %vm418 = vcmp.eq.f32.partialorder %v213, %v417
    %v419 = vsel %vm418, -inf, %v289
    %v420 = vsel %vm291, %v419, -inf
    %421 = vmax.xlane.f32.xlu0 %v420
    %v422 = vpop.xlane.xlu0 %421
    %v423 = vadd.f32 %v295, %v422
    %vm424 = vcmp.eq.f32.partialorder %v419, %v422
    %v425 = vsel %vm424, %v213, 16.0
    %v426 = vsel %vm291, %v425, inf
    %427 = vmin.xlane.f32.xlu0 %v426
    %v428 = vpop.xlane.xlu0 %427
    %vm429 = vcmp.eq.f32.partialorder %v213, %v428
    %v430 = vsel %vm429, -inf, %v419
    %v431 = vsel %vm291, %v430, -inf
    %432 = vmax.xlane.f32.xlu0 %v431
    %v433 = vpop.xlane.xlu0 %432
    %v434 = vadd.f32 %v423, %v433
    %vm435 = vcmp.eq.f32.partialorder %v430, %v433
    %v436 = vsel %vm435, %v213, 16.0
    %v437 = vsel %vm291, %v436, inf
    %438 = vmin.xlane.f32.xlu0 %v437
    %v439 = vpop.xlane.xlu0 %438
    %vm440 = vcmp.eq.f32.partialorder %v213, %v439
    %v441 = vsel %vm440, -inf, %v430
    %v442 = vsel %vm291, %v441, -inf
    %443 = vmax.xlane.f32.xlu0 %v442
    %v444 = vpop.xlane.xlu0 %443
    %v445 = vadd.f32 %v434, %v444
    %vm446 = vcmp.eq.f32.partialorder %v441, %v444
    %v447 = vsel %vm446, %v213, 16.0
    %v448 = vsel %vm291, %v447, inf
    %449 = vmin.xlane.f32.xlu0 %v448
    %v450 = vpop.xlane.xlu0 %449
    %vm451 = vcmp.eq.f32.partialorder %v213, %v450
    %v452 = vsel %vm451, -inf, %v441
    %v453 = vsel %vm291, %v452, -inf
    %454 = vmax.xlane.f32.xlu0 %v453
    %v455 = vpop.xlane.xlu0 %454
    %v456 = vadd.f32 %v445, %v455
    %vm457 = vcmp.eq.f32.partialorder %v452, %v455
    %v458 = vsel %vm457, %v213, 16.0
    %v459 = vsel %vm291, %v458, inf
    %460 = vmin.xlane.f32.xlu0 %v459
    %v461 = vpop.xlane.xlu0 %460
    %vm462 = vcmp.eq.f32.partialorder %v213, %v461
    %v463 = vsel %vm462, -inf, %v452
    %v464 = vsel %vm291, %v463, -inf
    %465 = vmax.xlane.f32.xlu0 %v464
    %v466 = vpop.xlane.xlu0 %465
    %v467 = vadd.f32 %v456, %v466
    %vm468 = vcmp.eq.f32.partialorder %v463, %v466
    %v469 = vsel %vm468, %v213, 16.0
    %v470 = vsel %vm291, %v469, inf
    %471 = vmin.xlane.f32.xlu0 %v470
    %v472 = vpop.xlane.xlu0 %471
    %vm473 = vcmp.eq.f32.partialorder %v213, %v472
    %v474 = vsel %vm473, -inf, %v463
    %v475 = vsel %vm291, %v474, -inf
    %476 = vmax.xlane.f32.xlu0 %v475
    %v477 = vpop.xlane.xlu0 %476
    %v478 = vadd.f32 %v467, %v477
    %vm479 = vcmp.eq.f32.partialorder %v474, %v477
    %v480 = vsel %vm479, %v213, 16.0
    %v481 = vsel %vm291, %v480, inf
    %482 = vmin.xlane.f32.xlu0 %v481
    %v483 = vpop.xlane.xlu0 %482
    %vm484 = vcmp.eq.f32.partialorder %v213, %v483
    %v485 = vsel %vm484, -inf, %v474
    %v486 = vsel %vm291, %v485, -inf
    %487 = vmax.xlane.f32.xlu0 %v486
    %v488 = vpop.xlane.xlu0 %487
    %v489 = vadd.f32 %v478, %v488
    %vm490 = vcmask 1043456
    %v491 = vsel %vm490, %v489, 0.0
    %v492 = vrot.slane %v491, 4
    %v493 = vadd.f32 %v491, %v492
    %v494 = vrot.slane %v493, 2
    %v495 = vadd.f32 %v493, %v494
    %v496 = vrot.slane %v495, 1
    %v497 = vadd.f32 %v495, %v496
    %v498 = vmul.f32 %v497, 0.03125
    %vm499 = vcmask 0
    %500 = vst.msk [vmem:[#allocation7] sm:$0x1] %vm499, %v498
    // Predicated region
    $region22: #{tpu_custom_call.1} parent=1 // pred_check
      _
    $region23: #{tpu_custom_call.1} parent=1 // pred_check_branch
      %502 = sbr.rel (0) target = $region25
    $region24: #{tpu_custom_call.1} parent=1 // pred_region
      %s504 = ssub.s32 16, 16
      %505 = vsyncadd [#allocation4], %s504
      %s507 = sshll.u32 [#allocation7], 4
      %s508 = int_to_ptr.vmem [resolvable:$true] %s507
      %510 = dma.vmem_to_hbm [thread:$0]  %s508, 16, %s3, [#allocation4]
    $region25: #{tpu_custom_call.1} parent=1 // pred_fallthru
      _
    // Predicated region
    $region26: #{tpu_custom_call.1} parent=1 // pred_check
      _
    $region27: #{tpu_custom_call.1} parent=1 // pred_check_branch
      %512 = sbr.rel (0) target = $region29
    $region28: #{tpu_custom_call.1} parent=1 // pred_region
      %513 = dma.done [#allocation4], 16
    $region29: #{tpu_custom_call.1} parent=1 // pred_fallthru
      _
    %514 = vsyncpa [#allocation3], 1
    %515 = vsyncpa [#allocation6], 1
    %516 = vsyncpa [#allocation4], 1

</llo_original>
